<compile_context>
chip_gen: v7x
topology: tpu7x:2x2x1
jax: 0.10.0
libtpu: 0.0.40
codegen_flags: <defaults>
</compile_context>

<pallas_src>
import jax
import jax.numpy as jnp
from jax.experimental import pallas as pl
from jax.experimental.pallas import tpu as pltpu

INPUT_DIM = 128    # stand-in for X_train.shape[1]
HIDDEN = 256
LATENT = 32
TB_DEFAULT = 256   # batch tile: fills the 256-wide MXU on v6e/v7x (2x128 on v5e)


def _round_up(n, m):
    return ((n + m - 1) // m) * m


def ae_kernel(x_ref,
              w1_ref, b1_ref, w2_ref, b2_ref,
              w3_ref, b3_ref, w4_ref, b4_ref,
              xrec_ref, z_ref):
    cdt = x_ref.dtype          # bf16 MXU operand dtype
    x = x_ref[...]

    # encoder: Linear(D,256) -> ReLU -> Linear(256,latent_pad)
    h1 = jnp.dot(x, w1_ref[...], preferred_element_type=jnp.float32) + b1_ref[...]
    h1 = jnp.maximum(h1, 0.0).astype(cdt)          # ReLU in f32, cast for next MXU op
    z = jnp.dot(h1, w2_ref[...], preferred_element_type=jnp.float32) + b2_ref[...]
    z_ref[...] = z.astype(z_ref.dtype)             # lane-dense (TB, 128) store

    # decoder: Linear(latent_pad,256) -> ReLU -> Linear(256,D)
    h2 = jnp.dot(z.astype(cdt), w3_ref[...],
                 preferred_element_type=jnp.float32) + b3_ref[...]
    h2 = jnp.maximum(h2, 0.0).astype(cdt)
    xr = jnp.dot(h2, w4_ref[...], preferred_element_type=jnp.float32) + b4_ref[...]
    xrec_ref[...] = xr.astype(xrec_ref.dtype)


def vanilla_autoencoder(x, params, *, tb=TB_DEFAULT, mxu_dtype=jnp.bfloat16):
    B, D = x.shape
    (w1, b1, w2, b2, w3, b3, w4, b4) = params
    H = w1.shape[1]
    L = w2.shape[1]
    Lp = _round_up(L, 128)

    # Batch tiling: large tile for MXU utilization, clamped so tiny batches don't
    # over-pad; pad B to a tile multiple and slice the tail off the outputs.
    tb = min(tb, _round_up(B, 8))
    Bp = _round_up(B, tb)
    if Bp != B:
        x = jnp.pad(x, ((0, Bp - B), (0, 0)))

    # Lane-pad the latent dim so z stores are unmasked 128-wide; padded weight
    # columns/rows are zero so the reconstruction is numerically unchanged.
    if Lp != L:
        w2 = jnp.pad(w2, ((0, 0), (0, Lp - L)))
        b2 = jnp.pad(b2, ((0, 0), (0, Lp - L)))
        w3 = jnp.pad(w3, ((0, Lp - L), (0, 0)))

    # bf16 operands for the MXU (f32 accumulation in-kernel); biases stay f32.
    xk = x.astype(mxu_dtype)
    w1k, w2k, w3k, w4k = (w.astype(mxu_dtype) for w in (w1, w2, w3, w4))

    def weight_spec(shape):
        # grid-invariant block: constant index_map -> DMA'd once, never re-fetched
        return pl.BlockSpec(shape, lambda i: (0, 0))

    grid = (Bp // tb,)
    out_shapes = (
        jax.ShapeDtypeStruct((Bp, D), jnp.float32),   # x_reconstructed (padded)
        jax.ShapeDtypeStruct((Bp, Lp), jnp.float32),  # z (lane-padded)
    )

    flops = 2 * Bp * (D * H + H * Lp + Lp * H + H * D)
    bytes_accessed = (
        xk.size * xk.dtype.itemsize
        + sum(a.size * a.dtype.itemsize
              for a in (w1k, b1, w2k, b2, w3k, b3, w4k, b4))
        + Bp * D * 4 + Bp * Lp * 4
    )

    xrec, z = pl.pallas_call(
        ae_kernel,
        out_shape=out_shapes,
        grid_spec=pltpu.PrefetchScalarGridSpec(
            num_scalar_prefetch=0,
            grid=grid,
            in_specs=[
                pl.BlockSpec((tb, D), lambda i: (i, 0)),       # x
                weight_spec((D, H)), weight_spec((1, H)),       # w1, b1
                weight_spec((H, Lp)), weight_spec((1, Lp)),     # w2, b2 (lane-padded)
                weight_spec((Lp, H)), weight_spec((1, H)),      # w3, b3
                weight_spec((H, D)), weight_spec((1, D)),       # w4, b4
            ],
            out_specs=[
                pl.BlockSpec((tb, D), lambda i: (i, 0)),        # x_reconstructed
                pl.BlockSpec((tb, Lp), lambda i: (i, 0)),       # z (lane-dense)
            ],
        ),
        compiler_params=pltpu.CompilerParams(
            dimension_semantics=("parallel",)),                 # megacore-shardable
        cost_estimate=pl.CostEstimate(
            flops=flops, transcendentals=0, bytes_accessed=bytes_accessed),
    )(xk, w1k, b1, w2k, b2, w3k, b3, w4k, b4)

    return xrec[:B], z[:B, :L]


def init_params(key, input_dim=INPUT_DIM, hidden=HIDDEN, latent=LATENT,
                dtype=jnp.float32):
    # PyTorch-Linear-style uniform(-1/sqrt(fan_in), 1/sqrt(fan_in)).
    def linear(key, fan_in, fan_out):
        kw, kb = jax.random.split(key)
        bound = 1.0 / jnp.sqrt(fan_in)
        w = jax.random.uniform(kw, (fan_in, fan_out), dtype, -bound, bound)
        b = jax.random.uniform(kb, (1, fan_out), dtype, -bound, bound)
        return w, b

    k1, k2, k3, k4 = jax.random.split(key, 4)
    w1, b1 = linear(k1, input_dim, hidden)   # encoder[0]
    w2, b2 = linear(k2, hidden, latent)      # encoder[2]
    w3, b3 = linear(k3, latent, hidden)      # decoder[0]
    w4, b4 = linear(k4, hidden, input_dim)   # decoder[2]
    return (w1, b1, w2, b2, w3, b3, w4, b4)


def reference_f32(x, params):
    (w1, b1, w2, b2, w3, b3, w4, b4) = params
    h1 = jnp.maximum(x @ w1 + b1, 0.0)
    z = h1 @ w2 + b2
    h2 = jnp.maximum(z @ w3 + b3, 0.0)
    xr = h2 @ w4 + b4
    return xr, z


def reference_bf16(x, params):
    # Mirrors the kernel's numerics: bf16 MXU operands, f32 accumulation/bias/ReLU.
    (w1, b1, w2, b2, w3, b3, w4, b4) = params
    bf = jnp.bfloat16
    dot = lambda a, b: jnp.dot(a.astype(bf), b.astype(bf),
                               preferred_element_type=jnp.float32)
    h1 = jnp.maximum(dot(x, w1) + b1, 0.0)
    z = dot(h1, w2) + b2
    h2 = jnp.maximum(dot(z, w3) + b3, 0.0)
    xr = dot(h2, w4) + b4
    return xr, z


if __name__ == "__main__":
    key = jax.random.PRNGKey(0)
    kx, kp = jax.random.split(key)

    B = 20  # deliberately not a multiple of 8 to exercise the padding path
    x = jax.random.normal(kx, (B, INPUT_DIM), jnp.float32)
    params = init_params(kp)

    xrec, z = vanilla_autoencoder(x, params)
    jax.block_until_ready((xrec, z))

    assert xrec.shape == (B, INPUT_DIM) and z.shape == (B, LATENT)
    assert xrec.dtype == jnp.float32 and z.dtype == jnp.float32

    # Tight check vs a reference with the same bf16-operand numerics.
    xrec_rb, z_rb = reference_bf16(x, params)
    assert jnp.allclose(xrec, xrec_rb, atol=1e-2, rtol=1e-2)
    assert jnp.allclose(z, z_rb, atol=1e-2, rtol=1e-2)

    # Looser sanity check vs the full-f32 reference (bf16 operands lose precision).
    xrec_rf, z_rf = reference_f32(x, params)
    assert jnp.allclose(xrec, xrec_rf, atol=5e-2, rtol=5e-2)
    assert jnp.allclose(z, z_rf, atol=5e-2, rtol=5e-2)

    print("KERNEL_OK")
</pallas_src>

<mosaic_0001>
module attributes {stable_mosaic.version = 11 : i64} {
  func.func @ae_kernel(%arg0: i32, %arg1: memref<24x128xbf16, #tpu.memory_space<vmem>>, %arg2: memref<128x256xbf16, #tpu.memory_space<vmem>>, %arg3: memref<1x256xf32, #tpu.memory_space<vmem>>, %arg4: memref<256x128xbf16, #tpu.memory_space<vmem>>, %arg5: memref<1x128xf32, #tpu.memory_space<vmem>>, %arg6: memref<128x256xbf16, #tpu.memory_space<vmem>>, %arg7: memref<1x256xf32, #tpu.memory_space<vmem>>, %arg8: memref<256x128xbf16, #tpu.memory_space<vmem>>, %arg9: memref<1x128xf32, #tpu.memory_space<vmem>>, %arg10: memref<24x128xf32, #tpu.memory_space<vmem>>, %arg11: memref<24x128xf32, #tpu.memory_space<vmem>>) attributes {dimension_semantics = [#tpu.dimension_semantics<parallel>], iteration_bounds = array<i64: 1>, scalar_prefetch = 0 : i64, scratch_operands = 0 : i64, tpu.core_type = #tpu.core_type<tc>, window_params = [{transform_indices = @transform_0, window_bounds = array<i64: 24, 128>}, {pipeline_mode = #tpu.pipeline_mode<synchronous>, transform_indices = @transform_1, window_bounds = array<i64: 128, 256>}, {pipeline_mode = #tpu.pipeline_mode<synchronous>, transform_indices = @transform_2, window_bounds = array<i64: 1, 256>}, {pipeline_mode = #tpu.pipeline_mode<synchronous>, transform_indices = @transform_3, window_bounds = array<i64: 256, 128>}, {pipeline_mode = #tpu.pipeline_mode<synchronous>, transform_indices = @transform_4, window_bounds = array<i64: 1, 128>}, {pipeline_mode = #tpu.pipeline_mode<synchronous>, transform_indices = @transform_5, window_bounds = array<i64: 128, 256>}, {pipeline_mode = #tpu.pipeline_mode<synchronous>, transform_indices = @transform_6, window_bounds = array<i64: 1, 256>}, {pipeline_mode = #tpu.pipeline_mode<synchronous>, transform_indices = @transform_7, window_bounds = array<i64: 256, 128>}, {pipeline_mode = #tpu.pipeline_mode<synchronous>, transform_indices = @transform_8, window_bounds = array<i64: 1, 128>}, {transform_indices = @transform_9, window_bounds = array<i64: 24, 128>}, {transform_indices = @transform_10, window_bounds = array<i64: 24, 128>}]} {
    %c0 = arith.constant 0 : index
    %c0_0 = arith.constant 0 : index
    %0 = vector.load %arg1[%c0, %c0_0] : memref<24x128xbf16, #tpu.memory_space<vmem>>, vector<24x128xbf16>
    %c0_1 = arith.constant 0 : index
    %c0_2 = arith.constant 0 : index
    %1 = vector.load %arg2[%c0_1, %c0_2] : memref<128x256xbf16, #tpu.memory_space<vmem>>, vector<128x256xbf16>
    %cst = arith.constant dense<0.000000e+00> : vector<24x256xf32>
    %2 = tpu.matmul %0, %1, %cst {dimension_numbers = #tpu.dot_dimension_numbers<[1], [0], [0], [1], [0, 0, 1, 1], [], []>} : vector<24x128xbf16>, vector<128x256xbf16>, vector<24x256xf32> -> vector<24x256xf32>
    %c0_3 = arith.constant 0 : index
    %c0_4 = arith.constant 0 : index
    %3 = vector.load %arg3[%c0_3, %c0_4] : memref<1x256xf32, #tpu.memory_space<vmem>>, vector<1x256xf32>
    %4 = vector.broadcast %3 : vector<1x256xf32> to vector<24x256xf32>
    %5 = arith.addf %2, %4 : vector<24x256xf32>
    %cst_5 = arith.constant 0.000000e+00 : f32
    %6 = vector.broadcast %cst_5 : f32 to vector<24x256xf32>
    %7 = arith.maximumf %5, %6 : vector<24x256xf32>
    %8 = arith.truncf %7 : vector<24x256xf32> to vector<24x256xbf16>
    %c0_6 = arith.constant 0 : index
    %c0_7 = arith.constant 0 : index
    %9 = vector.load %arg4[%c0_6, %c0_7] : memref<256x128xbf16, #tpu.memory_space<vmem>>, vector<256x128xbf16>
    %cst_8 = arith.constant dense<0.000000e+00> : vector<24x128xf32>
    %10 = tpu.matmul %8, %9, %cst_8 {dimension_numbers = #tpu.dot_dimension_numbers<[1], [0], [0], [1], [0, 0, 1, 1], [], []>} : vector<24x256xbf16>, vector<256x128xbf16>, vector<24x128xf32> -> vector<24x128xf32>
    %c0_9 = arith.constant 0 : index
    %c0_10 = arith.constant 0 : index
    %11 = vector.load %arg5[%c0_9, %c0_10] : memref<1x128xf32, #tpu.memory_space<vmem>>, vector<1x128xf32>
    %12 = vector.broadcast %11 : vector<1x128xf32> to vector<24x128xf32>
    %13 = arith.addf %10, %12 : vector<24x128xf32>
    %c0_11 = arith.constant 0 : index
    %c0_12 = arith.constant 0 : index
    %14 = vector.load %arg11[%c0_11, %c0_12] : memref<24x128xf32, #tpu.memory_space<vmem>>, vector<24x128xf32>
    tpu.vector_store %arg11[%c0_11, %c0_12], %13 {strides = array<i32>} : memref<24x128xf32, #tpu.memory_space<vmem>>, vector<24x128xf32>,
    %15 = arith.truncf %13 : vector<24x128xf32> to vector<24x128xbf16>
    %c0_13 = arith.constant 0 : index
    %c0_14 = arith.constant 0 : index
    %16 = vector.load %arg6[%c0_13, %c0_14] : memref<128x256xbf16, #tpu.memory_space<vmem>>, vector<128x256xbf16>
    %cst_15 = arith.constant dense<0.000000e+00> : vector<24x256xf32>
    %17 = tpu.matmul %15, %16, %cst_15 {dimension_numbers = #tpu.dot_dimension_numbers<[1], [0], [0], [1], [0, 0, 1, 1], [], []>} : vector<24x128xbf16>, vector<128x256xbf16>, vector<24x256xf32> -> vector<24x256xf32>
    %c0_16 = arith.constant 0 : index
    %c0_17 = arith.constant 0 : index
    %18 = vector.load %arg7[%c0_16, %c0_17] : memref<1x256xf32, #tpu.memory_space<vmem>>, vector<1x256xf32>
    %19 = vector.broadcast %18 : vector<1x256xf32> to vector<24x256xf32>
    %20 = arith.addf %17, %19 : vector<24x256xf32>
    %cst_18 = arith.constant 0.000000e+00 : f32
    %21 = vector.broadcast %cst_18 : f32 to vector<24x256xf32>
    %22 = arith.maximumf %20, %21 : vector<24x256xf32>
    %23 = arith.truncf %22 : vector<24x256xf32> to vector<24x256xbf16>
    %c0_19 = arith.constant 0 : index
    %c0_20 = arith.constant 0 : index
    %24 = vector.load %arg8[%c0_19, %c0_20] : memref<256x128xbf16, #tpu.memory_space<vmem>>, vector<256x128xbf16>
    %cst_21 = arith.constant dense<0.000000e+00> : vector<24x128xf32>
    %25 = tpu.matmul %23, %24, %cst_21 {dimension_numbers = #tpu.dot_dimension_numbers<[1], [0], [0], [1], [0, 0, 1, 1], [], []>} : vector<24x256xbf16>, vector<256x128xbf16>, vector<24x128xf32> -> vector<24x128xf32>
    %c0_22 = arith.constant 0 : index
    %c0_23 = arith.constant 0 : index
    %26 = vector.load %arg9[%c0_22, %c0_23] : memref<1x128xf32, #tpu.memory_space<vmem>>, vector<1x128xf32>
    %27 = vector.broadcast %26 : vector<1x128xf32> to vector<24x128xf32>
    %28 = arith.addf %25, %27 : vector<24x128xf32>
    %c0_24 = arith.constant 0 : index
    %c0_25 = arith.constant 0 : index
    %29 = vector.load %arg10[%c0_24, %c0_25] : memref<24x128xf32, #tpu.memory_space<vmem>>, vector<24x128xf32>
    tpu.vector_store %arg10[%c0_24, %c0_25], %28 {strides = array<i32>} : memref<24x128xf32, #tpu.memory_space<vmem>>, vector<24x128xf32>,
    return
  }
  func.func @transform_0(%arg0: i32) -> (i32, i32) {
    %c0_i32 = arith.constant 0 : i32
    %c0_i32_0 = arith.constant 0 : i32
    return %arg0, %c0_i32 : i32, i32
  }
  func.func @transform_1(%arg0: i32) -> (i32, i32) {
    %c0_i32 = arith.constant 0 : i32
    %c0_i32_0 = arith.constant 0 : i32
    %c0_i32_1 = arith.constant 0 : i32
    return %c0_i32, %c0_i32_0 : i32, i32
  }
  func.func @transform_2(%arg0: i32) -> (i32, i32) {
    %c0_i32 = arith.constant 0 : i32
    %c0_i32_0 = arith.constant 0 : i32
    %c0_i32_1 = arith.constant 0 : i32
    return %c0_i32, %c0_i32_0 : i32, i32
  }
  func.func @transform_3(%arg0: i32) -> (i32, i32) {
    %c0_i32 = arith.constant 0 : i32
    %c0_i32_0 = arith.constant 0 : i32
    %c0_i32_1 = arith.constant 0 : i32
    return %c0_i32, %c0_i32_0 : i32, i32
  }
  func.func @transform_4(%arg0: i32) -> (i32, i32) {
    %c0_i32 = arith.constant 0 : i32
    %c0_i32_0 = arith.constant 0 : i32
    %c0_i32_1 = arith.constant 0 : i32
    return %c0_i32, %c0_i32_0 : i32, i32
  }
  func.func @transform_5(%arg0: i32) -> (i32, i32) {
    %c0_i32 = arith.constant 0 : i32
    %c0_i32_0 = arith.constant 0 : i32
    %c0_i32_1 = arith.constant 0 : i32
    return %c0_i32, %c0_i32_0 : i32, i32
  }
  func.func @transform_6(%arg0: i32) -> (i32, i32) {
    %c0_i32 = arith.constant 0 : i32
    %c0_i32_0 = arith.constant 0 : i32
    %c0_i32_1 = arith.constant 0 : i32
    return %c0_i32, %c0_i32_0 : i32, i32
  }
  func.func @transform_7(%arg0: i32) -> (i32, i32) {
    %c0_i32 = arith.constant 0 : i32
    %c0_i32_0 = arith.constant 0 : i32
    %c0_i32_1 = arith.constant 0 : i32
    return %c0_i32, %c0_i32_0 : i32, i32
  }
  func.func @transform_8(%arg0: i32) -> (i32, i32) {
    %c0_i32 = arith.constant 0 : i32
    %c0_i32_0 = arith.constant 0 : i32
    %c0_i32_1 = arith.constant 0 : i32
    return %c0_i32, %c0_i32_0 : i32, i32
  }
  func.func @transform_9(%arg0: i32) -> (i32, i32) {
    %c0_i32 = arith.constant 0 : i32
    %c0_i32_0 = arith.constant 0 : i32
    return %arg0, %c0_i32 : i32, i32
  }
  func.func @transform_10(%arg0: i32) -> (i32, i32) {
    %c0_i32 = arith.constant 0 : i32
    %c0_i32_0 = arith.constant 0 : i32
    return %arg0, %c0_i32 : i32, i32
  }
}

</mosaic_0001>

<llo_original>
// kernel: tpu_custom_call.1
$region0: #{tpu_custom_call.1}
  #allocation0 [shape = 'u32[]', space=smem, size = 0x4, offset = 0x4, fixed_abs, tag = 'smem constant byte address 0x4 - core index']
  #allocation1 [shape = 'u32[144,128]{1,0:T(1,128)}', space=vmem, size = 0x12000, scoped, tag = 'internal scratch']
  %s0 = inlined_call_operand.hbm [shape: bf16[24,128], index: 0, kind: input, shape index: {}]
  %s1 = inlined_call_operand.hbm [shape: bf16[128,256], index: 1, kind: input, shape index: {}]
  %s2 = inlined_call_operand.vmem [shape: f32[1,256], index: 2, kind: input, shape index: {}]
  %s3 = inlined_call_operand.hbm [shape: bf16[256,128], index: 3, kind: input, shape index: {}]
  %s4 = inlined_call_operand.vmem [shape: f32[1,128], index: 4, kind: input, shape index: {}]
  %s5 = inlined_call_operand.hbm [shape: bf16[128,256], index: 5, kind: input, shape index: {}]
  %s6 = inlined_call_operand.vmem [shape: f32[1,256], index: 6, kind: input, shape index: {}]
  %s7 = inlined_call_operand.hbm [shape: bf16[256,128], index: 7, kind: input, shape index: {}]
  %s8 = inlined_call_operand.vmem [shape: f32[1,128], index: 8, kind: input, shape index: {}]
  %s9 = inlined_call_operand.hbm [shape: f32[24,128], index: 9, kind: output, shape index: {0}]
  %s10 = inlined_call_operand.hbm [shape: f32[24,128], index: 10, kind: output, shape index: {1}]
  %11 = xla_tuple %s9, %s10
  %s12 = sld [smem:[#allocation0]]
  $region74: #{tpu_custom_call.1} parent=0
    _
  %s14 = ssub.s32 1, %s12
  %s15 = scalar_select 0, %s14, %s12
  $region1: #{tpu_custom_call.1} parent=0
    #allocation2 [shape = 'u8[6144]{0}', space=vmem, size = 0x1800, scoped, tag = 'input window, operand 0, single buffered']
    #allocation3 [shape = 's32[1]{0}', space=sflag, size = 0x4, scoped, tag = 'scoped memory for tpu_custom_call.1']
    #allocation4 [shape = 's32[1]{0}', space=sflag, size = 0x4, scoped, tag = 'scoped memory for tpu_custom_call.1']
    #allocation5 [shape = 'u8[65536]{0}', space=vmem, size = 0x10000, scoped, tag = 'input window, operand 1, single buffered']
    #allocation6 [shape = 's32[1]{0}', space=sflag, size = 0x4, scoped, tag = 'scoped memory for tpu_custom_call.1']
    #allocation7 [shape = 'u8[65536]{0}', space=vmem, size = 0x10000, scoped, tag = 'input window, operand 3, single buffered']
    #allocation8 [shape = 'u8[65536]{0}', space=vmem, size = 0x10000, scoped, tag = 'input window, operand 5, single buffered']
    #allocation9 [shape = 's32[1]{0}', space=sflag, size = 0x4, scoped, tag = 'scoped memory for tpu_custom_call.1']
    #allocation10 [shape = 'u8[65536]{0}', space=vmem, size = 0x10000, scoped, tag = 'input window, operand 7, single buffered']
    #allocation11 [shape = 'u8[12288]{0}', space=vmem, size = 0x3000, scoped, tag = 'output window, operand 0, single buffered']
    #allocation12 [shape = 'u8[12288]{0}', space=vmem, size = 0x3000, scoped, tag = 'output window, operand 1, single buffered']
    #allocation13 [shape = 's32[1]{0}', space=sflag, size = 0x4, scoped, tag = 'scoped memory for tpu_custom_call.1']
    %16 = vsyncpa [#allocation3], 0
    %17 = vsyncpa [#allocation6], 0
    %18 = vsyncpa [#allocation9], 0
    %19 = vsyncpa [#allocation4], 0
    %20 = vsyncpa [#allocation13], 0
    // Predicated region
    $region2: #{tpu_custom_call.1} parent=1 // pred_check
      _
    $region3: #{tpu_custom_call.1} parent=1 // pred_check_branch
      %22 = sbr.rel (0) target = $region5
    $region4: #{tpu_custom_call.1} parent=1 // pred_region
      %s24 = ssub.s32 192, 192
      %25 = vsyncadd [#allocation3], %s24
      %s26 = sshll.u32 [#allocation2], 4
      %s27 = int_to_ptr.vmem [resolvable:$true] %s26
      %32 = dma.hbm_to_vmem [thread:$0]  %s0, 192, %s27, [#allocation3], 64, 64, 4
    $region5: #{tpu_custom_call.1} parent=1 // pred_fallthru
      _
    // Predicated region
    $region6: #{tpu_custom_call.1} parent=1 // pred_check
      _
    $region7: #{tpu_custom_call.1} parent=1 // pred_check_branch
      %34 = sbr.rel (0) target = $region9
    $region8: #{tpu_custom_call.1} parent=1 // pred_region
      %s36 = ssub.s32 2048, 2048
      %37 = vsyncadd [#allocation6], %s36
      %s38 = sshll.u32 [#allocation5], 4
      %s39 = int_to_ptr.vmem [resolvable:$true] %s38
      %44 = dma.hbm_to_vmem [thread:$0]  %s1, 2048, %s39, [#allocation6], 128, 128, 8
    $region9: #{tpu_custom_call.1} parent=1 // pred_fallthru
      _
    // Predicated region
    $region10: #{tpu_custom_call.1} parent=1 // pred_check
      _
    $region11: #{tpu_custom_call.1} parent=1 // pred_check_branch
      %46 = sbr.rel (0) target = $region13
    $region12: #{tpu_custom_call.1} parent=1 // pred_region
      _
    $region13: #{tpu_custom_call.1} parent=1 // pred_fallthru
      _
    // Predicated region
    $region14: #{tpu_custom_call.1} parent=1 // pred_check
      _
    $region15: #{tpu_custom_call.1} parent=1 // pred_check_branch
      %48 = sbr.rel (0) target = $region17
    $region16: #{tpu_custom_call.1} parent=1 // pred_region
      %s50 = ssub.s32 2048, 2048
      %51 = vsyncadd [#allocation6], %s50
      %s52 = sshll.u32 [#allocation7], 4
      %s53 = int_to_ptr.vmem [resolvable:$true] %s52
      %58 = dma.hbm_to_vmem [thread:$0]  %s3, 2048, %s53, [#allocation6], 64, 64, 4
    $region17: #{tpu_custom_call.1} parent=1 // pred_fallthru
      _
    // Predicated region
    $region18: #{tpu_custom_call.1} parent=1 // pred_check
      _
    $region19: #{tpu_custom_call.1} parent=1 // pred_check_branch
      %60 = sbr.rel (0) target = $region21
    $region20: #{tpu_custom_call.1} parent=1 // pred_region
      _
    $region21: #{tpu_custom_call.1} parent=1 // pred_fallthru
      _
    // Predicated region
    $region22: #{tpu_custom_call.1} parent=1 // pred_check
      _
    $region23: #{tpu_custom_call.1} parent=1 // pred_check_branch
      %62 = sbr.rel (0) target = $region25
    $region24: #{tpu_custom_call.1} parent=1 // pred_region
      %s64 = ssub.s32 2048, 2048
      %65 = vsyncadd [#allocation9], %s64
      %s66 = sshll.u32 [#allocation8], 4
      %s67 = int_to_ptr.vmem [resolvable:$true] %s66
      %72 = dma.hbm_to_vmem [thread:$0]  %s5, 2048, %s67, [#allocation9], 128, 128, 8
    $region25: #{tpu_custom_call.1} parent=1 // pred_fallthru
      _
    // Predicated region
    $region26: #{tpu_custom_call.1} parent=1 // pred_check
      _
    $region27: #{tpu_custom_call.1} parent=1 // pred_check_branch
      %74 = sbr.rel (0) target = $region29
    $region28: #{tpu_custom_call.1} parent=1 // pred_region
      _
    $region29: #{tpu_custom_call.1} parent=1 // pred_fallthru
      _
    // Predicated region
    $region30: #{tpu_custom_call.1} parent=1 // pred_check
      _
    $region31: #{tpu_custom_call.1} parent=1 // pred_check_branch
      %76 = sbr.rel (0) target = $region33
    $region32: #{tpu_custom_call.1} parent=1 // pred_region
      %s78 = ssub.s32 2048, 2048
      %79 = vsyncadd [#allocation9], %s78
      %s80 = sshll.u32 [#allocation10], 4
      %s81 = int_to_ptr.vmem [resolvable:$true] %s80
      %86 = dma.hbm_to_vmem [thread:$0]  %s7, 2048, %s81, [#allocation9], 64, 64, 4
    $region33: #{tpu_custom_call.1} parent=1 // pred_fallthru
      _
    // Predicated region
    $region34: #{tpu_custom_call.1} parent=1 // pred_check
      _
    $region35: #{tpu_custom_call.1} parent=1 // pred_check_branch
      %88 = sbr.rel (0) target = $region37
    $region36: #{tpu_custom_call.1} parent=1 // pred_region
      _
    $region37: #{tpu_custom_call.1} parent=1 // pred_fallthru
      _
    // Predicated region
    $region38: #{tpu_custom_call.1} parent=1 // pred_check
      _
    $region39: #{tpu_custom_call.1} parent=1 // pred_check_branch
      %90 = sbr.rel (0) target = $region41
    $region40: #{tpu_custom_call.1} parent=1 // pred_region
      %91 = dma.done [#allocation3], 192
    $region41: #{tpu_custom_call.1} parent=1 // pred_fallthru
      _
    // Predicated region
    $region42: #{tpu_custom_call.1} parent=1 // pred_check
      _
    $region43: #{tpu_custom_call.1} parent=1 // pred_check_branch
      %93 = sbr.rel (0) target = $region45
    $region44: #{tpu_custom_call.1} parent=1 // pred_region
      %94 = dma.done [#allocation6], 2048
    $region45: #{tpu_custom_call.1} parent=1 // pred_fallthru
      _
    // Predicated region
    $region46: #{tpu_custom_call.1} parent=1 // pred_check
      _
    $region47: #{tpu_custom_call.1} parent=1 // pred_check_branch
      %96 = sbr.rel (0) target = $region49
    $region48: #{tpu_custom_call.1} parent=1 // pred_region
      %97 = dma.done [#allocation6], 2048
    $region49: #{tpu_custom_call.1} parent=1 // pred_fallthru
      _
    // Predicated region
    $region50: #{tpu_custom_call.1} parent=1 // pred_check
      _
    $region51: #{tpu_custom_call.1} parent=1 // pred_check_branch
      %99 = sbr.rel (0) target = $region53
    $region52: #{tpu_custom_call.1} parent=1 // pred_region
      %100 = dma.done [#allocation9], 2048
    $region53: #{tpu_custom_call.1} parent=1 // pred_fallthru
      _
    // Predicated region
    $region54: #{tpu_custom_call.1} parent=1 // pred_check
      _
    $region55: #{tpu_custom_call.1} parent=1 // pred_check_branch
      %102 = sbr.rel (0) target = $region57
    $region56: #{tpu_custom_call.1} parent=1 // pred_region
      %103 = dma.done [#allocation9], 2048
    $region57: #{tpu_custom_call.1} parent=1 // pred_fallthru
      _
    %v105 = vld [vmem:[#allocation2] sm:$0xf]
    %v106 = vld [vmem:[#allocation2 + $0x4] sm:$0xf]
    %v107 = vld [vmem:[#allocation2 + $0x8] sm:$0xf]
    %v108 = vld [vmem:[#allocation5] sm:$0xff]
    %v109 = vld [vmem:[#allocation5 + $0x8] sm:$0xff]
    %v110 = vld [vmem:[#allocation5 + $0x10] sm:$0xff]
    %v111 = vld [vmem:[#allocation5 + $0x18] sm:$0xff]
    %v112 = vld [vmem:[#allocation5 + $0x20] sm:$0xff]
    %v113 = vld [vmem:[#allocation5 + $0x28] sm:$0xff]
    %v114 = vld [vmem:[#allocation5 + $0x30] sm:$0xff]
    %v115 = vld [vmem:[#allocation5 + $0x38] sm:$0xff]
    %v116 = vld [vmem:[#allocation5 + $0x40] sm:$0xff]
    %v117 = vld [vmem:[#allocation5 + $0x48] sm:$0xff]
    %v118 = vld [vmem:[#allocation5 + $0x50] sm:$0xff]
    %v119 = vld [vmem:[#allocation5 + $0x58] sm:$0xff]
    %v120 = vld [vmem:[#allocation5 + $0x60] sm:$0xff]
    %v121 = vld [vmem:[#allocation5 + $0x68] sm:$0xff]
    %v122 = vld [vmem:[#allocation5 + $0x70] sm:$0xff]
    %v123 = vld [vmem:[#allocation5 + $0x78] sm:$0xff]
    %v124 = vld [vmem:[%s2] sm:$0x3]
    %v126 = vlaneseq
    %v127 = vshrl.u32 %v126, 7
    %v128 = vsub.s32 0, %v127
    %v129 = vrot.slane %v124, %v128
    %v130 = vlaneseq
    %v131 = vshrl.u32 %v130, 7
    %v132 = vsub.s32 1, %v131
    %v133 = vrot.slane %v124, %v132
    %v139 = vunpack.c.l.b16 %v105
    %v140 = vunpack.c.l.b16 %v106
    %v141 = vunpack.c.l.b16 %v107
    %v142 = vpack.c.b16 %v140, %v139
    %v143 = vpack.c.b16 %v141, %v141
    %v162 = vunpack.c.l.b16 %v108
    %v163 = vunpack.c.h.b16 %v108
    %v164 = vunpack.c.l.b16 %v109
    %v165 = vunpack.c.h.b16 %v109
    %v166 = vunpack.c.l.b16 %v110
    %v167 = vunpack.c.h.b16 %v110
    %v168 = vunpack.c.l.b16 %v111
    %v169 = vunpack.c.h.b16 %v111
    %v170 = vunpack.c.l.b16 %v112
    %v171 = vunpack.c.h.b16 %v112
    %v172 = vunpack.c.l.b16 %v113
    %v173 = vunpack.c.h.b16 %v113
    %v174 = vunpack.c.l.b16 %v114
    %v175 = vunpack.c.h.b16 %v114
    %v176 = vunpack.c.l.b16 %v115
    %v177 = vunpack.c.h.b16 %v115
    %v178 = vunpack.c.l.b16 %v116
    %v179 = vunpack.c.h.b16 %v116
    %v180 = vunpack.c.l.b16 %v117
    %v181 = vunpack.c.h.b16 %v117
    %v182 = vunpack.c.l.b16 %v118
    %v183 = vunpack.c.h.b16 %v118
    %v184 = vunpack.c.l.b16 %v119
    %v185 = vunpack.c.h.b16 %v119
    %v186 = vunpack.c.l.b16 %v120
    %v187 = vunpack.c.h.b16 %v120
    %v188 = vunpack.c.l.b16 %v121
    %v189 = vunpack.c.h.b16 %v121
    %v190 = vunpack.c.l.b16 %v122
    %v191 = vunpack.c.h.b16 %v122
    %v192 = vunpack.c.l.b16 %v123
    %v193 = vunpack.c.h.b16 %v123
    %v194 = vpack.c.b16 %v164, %v162
    %v195 = vpack.c.b16 %v165, %v163
    %v196 = vpack.c.b16 %v168, %v166
    %v197 = vpack.c.b16 %v169, %v167
    %v198 = vpack.c.b16 %v172, %v170
    %v199 = vpack.c.b16 %v173, %v171
    %v200 = vpack.c.b16 %v176, %v174
    %v201 = vpack.c.b16 %v177, %v175
    %v202 = vpack.c.b16 %v180, %v178
    %v203 = vpack.c.b16 %v181, %v179
    %v204 = vpack.c.b16 %v184, %v182
    %v205 = vpack.c.b16 %v185, %v183
    %v206 = vpack.c.b16 %v188, %v186
    %v207 = vpack.c.b16 %v189, %v187
    %v208 = vpack.c.b16 %v192, %v190
    %v209 = vpack.c.b16 %v193, %v191
    %226 = vmatprep.subr.bf16.mxu0 %v195
    %227 = vmatpush1.bf16.msra.mxu0 %v194
    %228 = vmatprep.subr.bf16.mxu0 %v197
    %229 = vmatpush1.bf16.msra.mxu0 %v196
    %230 = vmatprep.subr.bf16.mxu0 %v199
    %231 = vmatpush1.bf16.msra.mxu0 %v198
    %232 = vmatprep.subr.bf16.mxu0 %v201
    %233 = vmatpush1.bf16.msra.mxu0 %v200
    %234 = vmatprep.subr.bf16.mxu0 %v203
    %235 = vmatpush1.bf16.msra.mxu0 %v202
    %236 = vmatprep.subr.bf16.mxu0 %v205
    %237 = vmatpush1.bf16.msra.mxu0 %v204
    %238 = vmatprep.subr.bf16.mxu0 %v207
    %239 = vmatpush1.bf16.msra.mxu0 %v206
    %240 = vmatprep.subr.bf16.mxu0 %v209
    %241 = vmatpush1.bf16.msra.mxu0 %v208
    %242 = vmatprep.subr.bf16.mxu0 0
    %243 = vmatpush1.bf16.msra.mxu0 0
    %244 = vmatprep.subr.bf16.mxu0 0
    %245 = vmatpush1.bf16.msra.mxu0 0
    %246 = vmatprep.subr.bf16.mxu0 0
    %247 = vmatpush1.bf16.msra.mxu0 0
    %248 = vmatprep.subr.bf16.mxu0 0
    %249 = vmatpush1.bf16.msra.mxu0 0
    %250 = vmatprep.subr.bf16.mxu0 0
    %251 = vmatpush1.bf16.msra.mxu0 0
    %252 = vmatprep.subr.bf16.mxu0 0
    %253 = vmatpush1.bf16.msra.mxu0 0
    %254 = vmatprep.subr.bf16.mxu0 0
    %255 = vmatpush1.bf16.msra.mxu0 0
    %256 = vmatprep.subr.bf16.mxu0 0
    %257 = vmatpush1.bf16.msra.mxu0 0
    %258 = vmatprep.mubr.bf16.mxu0 0
    %259 = vmatmul.mubr.bf16.gmra.mrb[0].mxu0 %v142
    %v260 = vpop.f32.mrb[0].mxu0
    %v261 = vadd.f32 %v129, %v260
    %v262 = vpop.f32.mrb[0].mxu0
    %v263 = vadd.f32 %v133, %v262
    %v264 = vpop.f32.mrb[0].mxu0
    %v265 = vadd.f32 %v129, %v264
    %v266 = vpop.f32.mrb[0].mxu0
    %v267 = vadd.f32 %v133, %v266
    %268 = vmatprep.mubr.bf16.mxu0 0
    %269 = vmatmul.mubr.bf16.gmra.mrb[0].mxu0 %v143
    %v270 = vpop.f32.mrb[0].mxu0
    %v271 = vadd.f32 %v129, %v270
    %v272 = vpop.f32.mrb[0].mxu0
    %v273 = vadd.f32 %v133, %v272
    %v274 = vpop.f32.mrb[0].mxu0
    %v275 = vpop.f32.mrb[0].mxu0
    %276 = vdwg.mxu0
    %v277 = vmax.f32 %v261, 0.0
    %v278 = vmax.f32 %v263, 0.0
    %v279 = vmax.f32 %v265, 0.0
    %v280 = vmax.f32 %v267, 0.0
    %v281 = vmax.f32 %v271, 0.0
    %v282 = vmax.f32 %v273, 0.0
    %v283 = vpack.c.bf16 %v279, %v277
    %v284 = vpack.c.bf16 %v280, %v278
    %v285 = vpack.c.bf16 %v281, %v281
    %v286 = vpack.c.bf16 %v282, %v282
    %v287 = vld [vmem:[#allocation7] sm:$0xf]
    %v288 = vld [vmem:[#allocation7 + $0x4] sm:$0xf]
    %v289 = vld [vmem:[#allocation7 + $0x8] sm:$0xf]
    %v290 = vld [vmem:[#allocation7 + $0xc] sm:$0xf]
    %v291 = vld [vmem:[#allocation7 + $0x10] sm:$0xf]
    %v292 = vld [vmem:[#allocation7 + $0x14] sm:$0xf]
    %v293 = vld [vmem:[#allocation7 + $0x18] sm:$0xf]
    %v294 = vld [vmem:[#allocation7 + $0x1c] sm:$0xf]
    %v295 = vld [vmem:[#allocation7 + $0x20] sm:$0xf]
    %v296 = vld [vmem:[#allocation7 + $0x24] sm:$0xf]
    %v297 = vld [vmem:[#allocation7 + $0x28] sm:$0xf]
    %v298 = vld [vmem:[#allocation7 + $0x2c] sm:$0xf]
    %v299 = vld [vmem:[#allocation7 + $0x30] sm:$0xf]
    %v300 = vld [vmem:[#allocation7 + $0x34] sm:$0xf]
    %v301 = vld [vmem:[#allocation7 + $0x38] sm:$0xf]
    %v302 = vld [vmem:[#allocation7 + $0x3c] sm:$0xf]
    %v303 = vld [vmem:[#allocation7 + $0x40] sm:$0xf]
    %v304 = vld [vmem:[#allocation7 + $0x44] sm:$0xf]
    %v305 = vld [vmem:[#allocation7 + $0x48] sm:$0xf]
    %v306 = vld [vmem:[#allocation7 + $0x4c] sm:$0xf]
    %v307 = vld [vmem:[#allocation7 + $0x50] sm:$0xf]
    %v308 = vld [vmem:[#allocation7 + $0x54] sm:$0xf]
    %v309 = vld [vmem:[#allocation7 + $0x58] sm:$0xf]
    %v310 = vld [vmem:[#allocation7 + $0x5c] sm:$0xf]
    %v311 = vld [vmem:[#allocation7 + $0x60] sm:$0xf]
    %v312 = vld [vmem:[#allocation7 + $0x64] sm:$0xf]
    %v313 = vld [vmem:[#allocation7 + $0x68] sm:$0xf]
    %v314 = vld [vmem:[#allocation7 + $0x6c] sm:$0xf]
    %v315 = vld [vmem:[#allocation7 + $0x70] sm:$0xf]
    %v316 = vld [vmem:[#allocation7 + $0x74] sm:$0xf]
    %v317 = vld [vmem:[#allocation7 + $0x78] sm:$0xf]
    %v318 = vld [vmem:[#allocation7 + $0x7c] sm:$0xf]
    %v319 = vld [vmem:[%s4] sm:$0x1]
    %v321 = vlaneseq
    %v322 = vshrl.u32 %v321, 7
    %v323 = vsub.s32 0, %v322
    %v324 = vrot.slane %v319, %v323
    %v358 = vunpack.c.l.b16 %v287
    %v359 = vunpack.c.l.b16 %v288
    %v360 = vunpack.c.l.b16 %v289
    %v361 = vunpack.c.l.b16 %v290
    %v362 = vunpack.c.l.b16 %v291
    %v363 = vunpack.c.l.b16 %v292
    %v364 = vunpack.c.l.b16 %v293
    %v365 = vunpack.c.l.b16 %v294
    %v366 = vunpack.c.l.b16 %v295
    %v367 = vunpack.c.l.b16 %v296
    %v368 = vunpack.c.l.b16 %v297
    %v369 = vunpack.c.l.b16 %v298
    %v370 = vunpack.c.l.b16 %v299
    %v371 = vunpack.c.l.b16 %v300
    %v372 = vunpack.c.l.b16 %v301
    %v373 = vunpack.c.l.b16 %v302
    %v374 = vunpack.c.l.b16 %v303
    %v375 = vunpack.c.l.b16 %v304
    %v376 = vunpack.c.l.b16 %v305
    %v377 = vunpack.c.l.b16 %v306
    %v378 = vunpack.c.l.b16 %v307
    %v379 = vunpack.c.l.b16 %v308
    %v380 = vunpack.c.l.b16 %v309
    %v381 = vunpack.c.l.b16 %v310
    %v382 = vunpack.c.l.b16 %v311
    %v383 = vunpack.c.l.b16 %v312
    %v384 = vunpack.c.l.b16 %v313
    %v385 = vunpack.c.l.b16 %v314
    %v386 = vunpack.c.l.b16 %v315
    %v387 = vunpack.c.l.b16 %v316
    %v388 = vunpack.c.l.b16 %v317
    %v389 = vunpack.c.l.b16 %v318
    %v390 = vpack.c.b16 %v359, %v358
    %v391 = vpack.c.b16 %v361, %v360
    %v392 = vpack.c.b16 %v363, %v362
    %v393 = vpack.c.b16 %v365, %v364
    %v394 = vpack.c.b16 %v367, %v366
    %v395 = vpack.c.b16 %v369, %v368
    %v396 = vpack.c.b16 %v371, %v370
    %v397 = vpack.c.b16 %v373, %v372
    %v398 = vpack.c.b16 %v375, %v374
    %v399 = vpack.c.b16 %v377, %v376
    %v400 = vpack.c.b16 %v379, %v378
    %v401 = vpack.c.b16 %v381, %v380
    %v402 = vpack.c.b16 %v383, %v382
    %v403 = vpack.c.b16 %v385, %v384
    %v404 = vpack.c.b16 %v387, %v386
    %v405 = vpack.c.b16 %v389, %v388
    %422 = vmatprep.subr.bf16.mxu0 0
    %423 = vmatpush1.bf16.msra.mxu0 %v390
    %424 = vmatprep.subr.bf16.mxu0 0
    %425 = vmatpush1.bf16.msra.mxu0 %v391
    %426 = vmatprep.subr.bf16.mxu0 0
    %427 = vmatpush1.bf16.msra.mxu0 %v392
    %428 = vmatprep.subr.bf16.mxu0 0
    %429 = vmatpush1.bf16.msra.mxu0 %v393
    %430 = vmatprep.subr.bf16.mxu0 0
    %431 = vmatpush1.bf16.msra.mxu0 %v394
    %432 = vmatprep.subr.bf16.mxu0 0
    %433 = vmatpush1.bf16.msra.mxu0 %v395
    %434 = vmatprep.subr.bf16.mxu0 0
    %435 = vmatpush1.bf16.msra.mxu0 %v396
    %436 = vmatprep.subr.bf16.mxu0 0
    %437 = vmatpush1.bf16.msra.mxu0 %v397
    %438 = vmatprep.subr.bf16.mxu0 0
    %439 = vmatpush1.bf16.msra.mxu0 %v398
    %440 = vmatprep.subr.bf16.mxu0 0
    %441 = vmatpush1.bf16.msra.mxu0 %v399
    %442 = vmatprep.subr.bf16.mxu0 0
    %443 = vmatpush1.bf16.msra.mxu0 %v400
    %444 = vmatprep.subr.bf16.mxu0 0
    %445 = vmatpush1.bf16.msra.mxu0 %v401
    %446 = vmatprep.subr.bf16.mxu0 0
    %447 = vmatpush1.bf16.msra.mxu0 %v402
    %448 = vmatprep.subr.bf16.mxu0 0
    %449 = vmatpush1.bf16.msra.mxu0 %v403
    %450 = vmatprep.subr.bf16.mxu0 0
    %451 = vmatpush1.bf16.msra.mxu0 %v404
    %452 = vmatprep.subr.bf16.mxu0 0
    %453 = vmatpush1.bf16.msra.mxu0 %v405
    %454 = vmatprep.mubr.bf16.mxu0 %v284
    %455 = vmatmul.mubr.bf16.gmra.mrb[0].mxu0 %v283
    %v456 = vpop.f32.mrb[0].mxu0
    %v457 = vadd.f32 %v324, %v456
    %v458 = vpop.f32.mrb[0].mxu0
    %v459 = vpop.f32.mrb[0].mxu0
    %v460 = vadd.f32 %v324, %v459
    %v461 = vpop.f32.mrb[0].mxu0
    %462 = vmatprep.mubr.bf16.mxu0 %v286
    %463 = vmatmul.mubr.bf16.gmra.mrb[0].mxu0 %v285
    %v464 = vpop.f32.mrb[0].mxu0
    %v465 = vadd.f32 %v324, %v464
    %v466 = vpop.f32.mrb[0].mxu0
    %v467 = vpop.f32.mrb[0].mxu0
    %v468 = vpop.f32.mrb[0].mxu0
    %469 = vdwg.mxu0
    %470 = vst [vmem:[#allocation12] sm:$0xff] %v457
    %471 = vst [vmem:[#allocation12 + $0x8] sm:$0xff] %v460
    %472 = vst [vmem:[#allocation12 + $0x10] sm:$0xff] %v465
    %v473 = vpack.c.bf16 %v460, %v457
    %v474 = vpack.c.bf16 %v465, %v465
    %v475 = vld [vmem:[#allocation8] sm:$0xff]
    %v476 = vld [vmem:[#allocation8 + $0x8] sm:$0xff]
    %v477 = vld [vmem:[#allocation8 + $0x10] sm:$0xff]
    %v478 = vld [vmem:[#allocation8 + $0x18] sm:$0xff]
    %v479 = vld [vmem:[#allocation8 + $0x20] sm:$0xff]
    %v480 = vld [vmem:[#allocation8 + $0x28] sm:$0xff]
    %v481 = vld [vmem:[#allocation8 + $0x30] sm:$0xff]
    %v482 = vld [vmem:[#allocation8 + $0x38] sm:$0xff]
    %v483 = vld [vmem:[#allocation8 + $0x40] sm:$0xff]
    %v484 = vld [vmem:[#allocation8 + $0x48] sm:$0xff]
    %v485 = vld [vmem:[#allocation8 + $0x50] sm:$0xff]
    %v486 = vld [vmem:[#allocation8 + $0x58] sm:$0xff]
    %v487 = vld [vmem:[#allocation8 + $0x60] sm:$0xff]
    %v488 = vld [vmem:[#allocation8 + $0x68] sm:$0xff]
    %v489 = vld [vmem:[#allocation8 + $0x70] sm:$0xff]
    %v490 = vld [vmem:[#allocation8 + $0x78] sm:$0xff]
    %v491 = vld [vmem:[%s6] sm:$0x3]
    %v493 = vlaneseq
    %v494 = vshrl.u32 %v493, 7
    %v495 = vsub.s32 0, %v494
    %v496 = vrot.slane %v491, %v495
    %v497 = vlaneseq
    %v498 = vshrl.u32 %v497, 7
    %v499 = vsub.s32 1, %v498
    %v500 = vrot.slane %v491, %v499
    %v519 = vunpack.c.l.b16 %v475
    %v520 = vunpack.c.h.b16 %v475
    %v521 = vunpack.c.l.b16 %v476
    %v522 = vunpack.c.h.b16 %v476
    %v523 = vunpack.c.l.b16 %v477
    %v524 = vunpack.c.h.b16 %v477
    %v525 = vunpack.c.l.b16 %v478
    %v526 = vunpack.c.h.b16 %v478
    %v527 = vunpack.c.l.b16 %v479
    %v528 = vunpack.c.h.b16 %v479
    %v529 = vunpack.c.l.b16 %v480
    %v530 = vunpack.c.h.b16 %v480
    %v531 = vunpack.c.l.b16 %v481
    %v532 = vunpack.c.h.b16 %v481
    %v533 = vunpack.c.l.b16 %v482
    %v534 = vunpack.c.h.b16 %v482
    %v535 = vunpack.c.l.b16 %v483
    %v536 = vunpack.c.h.b16 %v483
    %v537 = vunpack.c.l.b16 %v484
    %v538 = vunpack.c.h.b16 %v484
    %v539 = vunpack.c.l.b16 %v485
    %v540 = vunpack.c.h.b16 %v485
    %v541 = vunpack.c.l.b16 %v486
    %v542 = vunpack.c.h.b16 %v486
    %v543 = vunpack.c.l.b16 %v487
    %v544 = vunpack.c.h.b16 %v487
    %v545 = vunpack.c.l.b16 %v488
    %v546 = vunpack.c.h.b16 %v488
    %v547 = vunpack.c.l.b16 %v489
    %v548 = vunpack.c.h.b16 %v489
    %v549 = vunpack.c.l.b16 %v490
    %v550 = vunpack.c.h.b16 %v490
    %v551 = vpack.c.b16 %v521, %v519
    %v552 = vpack.c.b16 %v522, %v520
    %v553 = vpack.c.b16 %v525, %v523
    %v554 = vpack.c.b16 %v526, %v524
    %v555 = vpack.c.b16 %v529, %v527
    %v556 = vpack.c.b16 %v530, %v528
    %v557 = vpack.c.b16 %v533, %v531
    %v558 = vpack.c.b16 %v534, %v532
    %v559 = vpack.c.b16 %v537, %v535
    %v560 = vpack.c.b16 %v538, %v536
    %v561 = vpack.c.b16 %v541, %v539
    %v562 = vpack.c.b16 %v542, %v540
    %v563 = vpack.c.b16 %v545, %v543
    %v564 = vpack.c.b16 %v546, %v544
    %v565 = vpack.c.b16 %v549, %v547
    %v566 = vpack.c.b16 %v550, %v548
    %583 = vmatprep.subr.bf16.mxu0 %v552
    %584 = vmatpush1.bf16.msra.mxu0 %v551
    %585 = vmatprep.subr.bf16.mxu0 %v554
    %586 = vmatpush1.bf16.msra.mxu0 %v553
    %587 = vmatprep.subr.bf16.mxu0 %v556
    %588 = vmatpush1.bf16.msra.mxu0 %v555
    %589 = vmatprep.subr.bf16.mxu0 %v558
    %590 = vmatpush1.bf16.msra.mxu0 %v557
    %591 = vmatprep.subr.bf16.mxu0 %v560
    %592 = vmatpush1.bf16.msra.mxu0 %v559
    %593 = vmatprep.subr.bf16.mxu0 %v562
    %594 = vmatpush1.bf16.msra.mxu0 %v561
    %595 = vmatprep.subr.bf16.mxu0 %v564
    %596 = vmatpush1.bf16.msra.mxu0 %v563
    %597 = vmatprep.subr.bf16.mxu0 %v566
    %598 = vmatpush1.bf16.msra.mxu0 %v565
    %599 = vmatprep.subr.bf16.mxu0 0
    %600 = vmatpush1.bf16.msra.mxu0 0
    %601 = vmatprep.subr.bf16.mxu0 0
    %602 = vmatpush1.bf16.msra.mxu0 0
    %603 = vmatprep.subr.bf16.mxu0 0
    %604 = vmatpush1.bf16.msra.mxu0 0
    %605 = vmatprep.subr.bf16.mxu0 0
    %606 = vmatpush1.bf16.msra.mxu0 0
    %607 = vmatprep.subr.bf16.mxu0 0
    %608 = vmatpush1.bf16.msra.mxu0 0
    %609 = vmatprep.subr.bf16.mxu0 0
    %610 = vmatpush1.bf16.msra.mxu0 0
    %611 = vmatprep.subr.bf16.mxu0 0
    %612 = vmatpush1.bf16.msra.mxu0 0
    %613 = vmatprep.subr.bf16.mxu0 0
    %614 = vmatpush1.bf16.msra.mxu0 0
    %615 = vmatprep.mubr.bf16.mxu0 0
    %616 = vmatmul.mubr.bf16.gmra.mrb[0].mxu0 %v473
    %v617 = vpop.f32.mrb[0].mxu0
    %v618 = vadd.f32 %v496, %v617
    %v619 = vpop.f32.mrb[0].mxu0
    %v620 = vadd.f32 %v500, %v619
    %v621 = vpop.f32.mrb[0].mxu0
    %v622 = vadd.f32 %v496, %v621
    %v623 = vpop.f32.mrb[0].mxu0
    %v624 = vadd.f32 %v500, %v623
    %625 = vmatprep.mubr.bf16.mxu0 0
    %626 = vmatmul.mubr.bf16.gmra.mrb[0].mxu0 %v474
    %v627 = vpop.f32.mrb[0].mxu0
    %v628 = vadd.f32 %v496, %v627
    %v629 = vpop.f32.mrb[0].mxu0
    %v630 = vadd.f32 %v500, %v629
    %v631 = vpop.f32.mrb[0].mxu0
    %v632 = vpop.f32.mrb[0].mxu0
    %633 = vdwg.mxu0
    %v634 = vmax.f32 %v618, 0.0
    %v635 = vmax.f32 %v620, 0.0
    %v636 = vmax.f32 %v622, 0.0
    %v637 = vmax.f32 %v624, 0.0
    %v638 = vmax.f32 %v628, 0.0
    %v639 = vmax.f32 %v630, 0.0
    %v640 = vpack.c.bf16 %v636, %v634
    %v641 = vpack.c.bf16 %v637, %v635
    %v642 = vpack.c.bf16 %v638, %v638
    %v643 = vpack.c.bf16 %v639, %v639
    %v644 = vld [vmem:[#allocation10] sm:$0xf]
    %v645 = vld [vmem:[#allocation10 + $0x4] sm:$0xf]
    %v646 = vld [vmem:[#allocation10 + $0x8] sm:$0xf]
    %v647 = vld [vmem:[#allocation10 + $0xc] sm:$0xf]
    %v648 = vld [vmem:[#allocation10 + $0x10] sm:$0xf]
    %v649 = vld [vmem:[#allocation10 + $0x14] sm:$0xf]
    %v650 = vld [vmem:[#allocation10 + $0x18] sm:$0xf]
    %v651 = vld [vmem:[#allocation10 + $0x1c] sm:$0xf]
    %v652 = vld [vmem:[#allocation10 + $0x20] sm:$0xf]
    %v653 = vld [vmem:[#allocation10 + $0x24] sm:$0xf]
    %v654 = vld [vmem:[#allocation10 + $0x28] sm:$0xf]
    %v655 = vld [vmem:[#allocation10 + $0x2c] sm:$0xf]
    %v656 = vld [vmem:[#allocation10 + $0x30] sm:$0xf]
    %v657 = vld [vmem:[#allocation10 + $0x34] sm:$0xf]
    %v658 = vld [vmem:[#allocation10 + $0x38] sm:$0xf]
    %v659 = vld [vmem:[#allocation10 + $0x3c] sm:$0xf]
    %v660 = vld [vmem:[#allocation10 + $0x40] sm:$0xf]
    %v661 = vld [vmem:[#allocation10 + $0x44] sm:$0xf]
    %v662 = vld [vmem:[#allocation10 + $0x48] sm:$0xf]
    %v663 = vld [vmem:[#allocation10 + $0x4c] sm:$0xf]
    %v664 = vld [vmem:[#allocation10 + $0x50] sm:$0xf]
    %v665 = vld [vmem:[#allocation10 + $0x54] sm:$0xf]
    %v666 = vld [vmem:[#allocation10 + $0x58] sm:$0xf]
    %v667 = vld [vmem:[#allocation10 + $0x5c] sm:$0xf]
    %v668 = vld [vmem:[#allocation10 + $0x60] sm:$0xf]
    %v669 = vld [vmem:[#allocation10 + $0x64] sm:$0xf]
    %v670 = vld [vmem:[#allocation10 + $0x68] sm:$0xf]
    %v671 = vld [vmem:[#allocation10 + $0x6c] sm:$0xf]
    %v672 = vld [vmem:[#allocation10 + $0x70] sm:$0xf]
    %v673 = vld [vmem:[#allocation10 + $0x74] sm:$0xf]
    %v674 = vld [vmem:[#allocation10 + $0x78] sm:$0xf]
    %v675 = vld [vmem:[#allocation10 + $0x7c] sm:$0xf]
    %v676 = vld [vmem:[%s8] sm:$0x1]
    %v678 = vlaneseq
    %v679 = vshrl.u32 %v678, 7
    %v680 = vsub.s32 0, %v679
    %v681 = vrot.slane %v676, %v680
    %v715 = vunpack.c.l.b16 %v644
    %v716 = vunpack.c.l.b16 %v645
    %v717 = vunpack.c.l.b16 %v646
    %v718 = vunpack.c.l.b16 %v647
    %v719 = vunpack.c.l.b16 %v648
    %v720 = vunpack.c.l.b16 %v649
    %v721 = vunpack.c.l.b16 %v650
    %v722 = vunpack.c.l.b16 %v651
    %v723 = vunpack.c.l.b16 %v652
    %v724 = vunpack.c.l.b16 %v653
    %v725 = vunpack.c.l.b16 %v654
    %v726 = vunpack.c.l.b16 %v655
    %v727 = vunpack.c.l.b16 %v656
    %v728 = vunpack.c.l.b16 %v657
    %v729 = vunpack.c.l.b16 %v658
    %v730 = vunpack.c.l.b16 %v659
    %v731 = vunpack.c.l.b16 %v660
    %v732 = vunpack.c.l.b16 %v661
    %v733 = vunpack.c.l.b16 %v662
    %v734 = vunpack.c.l.b16 %v663
    %v735 = vunpack.c.l.b16 %v664
    %v736 = vunpack.c.l.b16 %v665
    %v737 = vunpack.c.l.b16 %v666
    %v738 = vunpack.c.l.b16 %v667
    %v739 = vunpack.c.l.b16 %v668
    %v740 = vunpack.c.l.b16 %v669
    %v741 = vunpack.c.l.b16 %v670
    %v742 = vunpack.c.l.b16 %v671
    %v743 = vunpack.c.l.b16 %v672
    %v744 = vunpack.c.l.b16 %v673
    %v745 = vunpack.c.l.b16 %v674
    %v746 = vunpack.c.l.b16 %v675
    %v747 = vpack.c.b16 %v716, %v715
    %v748 = vpack.c.b16 %v718, %v717
    %v749 = vpack.c.b16 %v720, %v719
    %v750 = vpack.c.b16 %v722, %v721
    %v751 = vpack.c.b16 %v724, %v723
    %v752 = vpack.c.b16 %v726, %v725
    %v753 = vpack.c.b16 %v728, %v727
    %v754 = vpack.c.b16 %v730, %v729
    %v755 = vpack.c.b16 %v732, %v731
    %v756 = vpack.c.b16 %v734, %v733
    %v757 = vpack.c.b16 %v736, %v735
    %v758 = vpack.c.b16 %v738, %v737
    %v759 = vpack.c.b16 %v740, %v739
    %v760 = vpack.c.b16 %v742, %v741
    %v761 = vpack.c.b16 %v744, %v743
    %v762 = vpack.c.b16 %v746, %v745
    %779 = vmatprep.subr.bf16.mxu0 0
    %780 = vmatpush1.bf16.msra.mxu0 %v747
    %781 = vmatprep.subr.bf16.mxu0 0
    %782 = vmatpush1.bf16.msra.mxu0 %v748
    %783 = vmatprep.subr.bf16.mxu0 0
    %784 = vmatpush1.bf16.msra.mxu0 %v749
    %785 = vmatprep.subr.bf16.mxu0 0
    %786 = vmatpush1.bf16.msra.mxu0 %v750
    %787 = vmatprep.subr.bf16.mxu0 0
    %788 = vmatpush1.bf16.msra.mxu0 %v751
    %789 = vmatprep.subr.bf16.mxu0 0
    %790 = vmatpush1.bf16.msra.mxu0 %v752
    %791 = vmatprep.subr.bf16.mxu0 0
    %792 = vmatpush1.bf16.msra.mxu0 %v753
    %793 = vmatprep.subr.bf16.mxu0 0
    %794 = vmatpush1.bf16.msra.mxu0 %v754
    %795 = vmatprep.subr.bf16.mxu0 0
    %796 = vmatpush1.bf16.msra.mxu0 %v755
    %797 = vmatprep.subr.bf16.mxu0 0
    %798 = vmatpush1.bf16.msra.mxu0 %v756
    %799 = vmatprep.subr.bf16.mxu0 0
    %800 = vmatpush1.bf16.msra.mxu0 %v757
    %801 = vmatprep.subr.bf16.mxu0 0
    %802 = vmatpush1.bf16.msra.mxu0 %v758
    %803 = vmatprep.subr.bf16.mxu0 0
    %804 = vmatpush1.bf16.msra.mxu0 %v759
    %805 = vmatprep.subr.bf16.mxu0 0
    %806 = vmatpush1.bf16.msra.mxu0 %v760
    %807 = vmatprep.subr.bf16.mxu0 0
    %808 = vmatpush1.bf16.msra.mxu0 %v761
    %809 = vmatprep.subr.bf16.mxu0 0
    %810 = vmatpush1.bf16.msra.mxu0 %v762
    %811 = vmatprep.mubr.bf16.mxu0 %v641
    %812 = vmatmul.mubr.bf16.gmra.mrb[0].mxu0 %v640
    %v813 = vpop.f32.mrb[0].mxu0
    %v814 = vadd.f32 %v681, %v813
    %v815 = vpop.f32.mrb[0].mxu0
    %v816 = vpop.f32.mrb[0].mxu0
    %v817 = vadd.f32 %v681, %v816
    %v818 = vpop.f32.mrb[0].mxu0
    %819 = vmatprep.mubr.bf16.mxu0 %v643
    %820 = vmatmul.mubr.bf16.gmra.mrb[0].mxu0 %v642
    %v821 = vpop.f32.mrb[0].mxu0
    %v822 = vadd.f32 %v681, %v821
    %v823 = vpop.f32.mrb[0].mxu0
    %v824 = vpop.f32.mrb[0].mxu0
    %v825 = vpop.f32.mrb[0].mxu0
    %826 = vdwg.mxu0
    %827 = vst [vmem:[#allocation11] sm:$0xff] %v814
    %828 = vst [vmem:[#allocation11 + $0x8] sm:$0xff] %v817
    %829 = vst [vmem:[#allocation11 + $0x10] sm:$0xff] %v822
    // Predicated region
    $region58: #{tpu_custom_call.1} parent=1 // pred_check
      _
    $region59: #{tpu_custom_call.1} parent=1 // pred_check_branch
      %831 = sbr.rel (0) target = $region61
    $region60: #{tpu_custom_call.1} parent=1 // pred_region
      %s833 = ssub.s32 384, 384
      %834 = vsyncadd [#allocation4], %s833
      %s835 = sshll.u32 [#allocation11], 4
      %s836 = int_to_ptr.vmem [resolvable:$true] %s835
      %841 = dma.vmem_to_hbm [thread:$0]  %s836, 384, %s9, [#allocation4], 128, 128, 8
    $region61: #{tpu_custom_call.1} parent=1 // pred_fallthru
      _
    // Predicated region
    $region62: #{tpu_custom_call.1} parent=1 // pred_check
      _
    $region63: #{tpu_custom_call.1} parent=1 // pred_check_branch
      %843 = sbr.rel (0) target = $region65
    $region64: #{tpu_custom_call.1} parent=1 // pred_region
      %s845 = ssub.s32 384, 384
      %846 = vsyncadd [#allocation13], %s845
      %s847 = sshll.u32 [#allocation12], 4
      %s848 = int_to_ptr.vmem [resolvable:$true] %s847
      %853 = dma.vmem_to_hbm [thread:$0]  %s848, 384, %s10, [#allocation13], 128, 128, 8
    $region65: #{tpu_custom_call.1} parent=1 // pred_fallthru
      _
    // Predicated region
    $region66: #{tpu_custom_call.1} parent=1 // pred_check
      _
    $region67: #{tpu_custom_call.1} parent=1 // pred_check_branch
      %855 = sbr.rel (0) target = $region69
    $region68: #{tpu_custom_call.1} parent=1 // pred_region
      %856 = dma.done [#allocation4], 384
    $region69: #{tpu_custom_call.1} parent=1 // pred_fallthru
      _
    // Predicated region
    $region70: #{tpu_custom_call.1} parent=1 // pred_check
      _
    $region71: #{tpu_custom_call.1} parent=1 // pred_check_branch
      %858 = sbr.rel (0) target = $region73
    $region72: #{tpu_custom_call.1} parent=1 // pred_region
      %859 = dma.done [#allocation13], 384
    $region73: #{tpu_custom_call.1} parent=1 // pred_fallthru
      _
    %860 = vsyncpa [#allocation3], 1
    %861 = vsyncpa [#allocation6], 1
    %862 = vsyncpa [#allocation9], 1
    %863 = vsyncpa [#allocation4], 1
    %864 = vsyncpa [#allocation13], 1

</llo_original>
